<compile_context>
chip_gen: v7x
topology: tpu7x:2x2x1
jax: 0.10.0
libtpu: 0.0.40
codegen_flags: <defaults>
</compile_context>

<pallas_src>
import jax
import jax.numpy as jnp
from jax.experimental import pallas as pl
from jax.experimental.pallas import tpu as pltpu


def _lift_kernel(x_ref, o_ref):
    # x_ref: (Tn, C)      one tile of input points
    # o_ref: (Tn, A, C)   same tile broadcast across the anchor axis
    x = x_ref[...]
    o_ref[...] = jnp.broadcast_to(x[:, None, :], o_ref.shape)


def lift_block_epn(x, kanchor, *, tile_n=512):
    """x: (N, C). Returns (N, kanchor, C) = x broadcast along a new anchor dim."""
    n, c = x.shape
    a = kanchor

    # Row tile: as large as possible, multiple of 8 (sublane) when tiling,
    # capped so the double-buffered in+out blocks stay well inside VMEM.
    if n <= tile_n:
        tn = n
    else:
        tn = min(tile_n, (n // 8) * 8)
        tn = max(tn, 8)
    grid = (pl.cdiv(n, tn),)

    out = pl.pallas_call(
        _lift_kernel,
        out_shape=jax.ShapeDtypeStruct((n, a, c), x.dtype),
        grid=grid,
        in_specs=[
            pl.BlockSpec((tn, c), lambda i: (i, 0)),
        ],
        out_specs=pl.BlockSpec((tn, a, c), lambda i: (i, 0, 0)),
        compiler_params=pltpu.CompilerParams(
            dimension_semantics=("parallel",),
            vmem_limit_bytes=64 * 1024 * 1024,
        ),
    )(x)
    return out


def _reference(x, kanchor):
    # Pure-JAX mirror of x.unsqueeze(1).expand(-1, kanchor, -1).
    n, c = x.shape
    return jnp.broadcast_to(x[:, None, :], (n, kanchor, c))


if __name__ == "__main__":
    num_points = 64    # N (kept a multiple of the row tile for the example)
    num_channels = 32  # C  (in_dim)
    kanchor = 4        # config.kanchor

    key = jax.random.PRNGKey(0)
    x = jax.random.normal(key, (num_points, num_channels), dtype=jnp.float32)

    # Use a small tile here so the grid actually has >1 step on tiny inputs.
    out = lift_block_epn(x, kanchor, tile_n=32)
    out = jax.block_until_ready(out)

    ref = _reference(x, kanchor)
    assert out.shape == ref.shape == (num_points, kanchor, num_channels)
    assert jnp.array_equal(out, ref)

    print("KERNEL_OK")
</pallas_src>

<mosaic_0001>
module attributes {stable_mosaic.version = 11 : i64} {
  func.func @_lift_kernel(%arg0: i32, %arg1: memref<32x32xf32, #tpu.memory_space<vmem>>, %arg2: memref<32x4x32xf32, #tpu.memory_space<vmem>>) attributes {dimension_semantics = [#tpu.dimension_semantics<parallel>], iteration_bounds = array<i64: 2>, scalar_prefetch = 0 : i64, scratch_operands = 0 : i64, tpu.core_type = #tpu.core_type<tc>, window_params = [{transform_indices = @transform_0, window_bounds = array<i64: 32, 32>}, {transform_indices = @transform_1, window_bounds = array<i64: 32, 4, 32>}]} {
    %c0 = arith.constant 0 : index
    %c0_0 = arith.constant 0 : index
    %0 = vector.load %arg1[%c0, %c0_0] : memref<32x32xf32, #tpu.memory_space<vmem>>, vector<32x32xf32>
    %1 = vector.shape_cast %0 : vector<32x32xf32> to vector<32x1x32xf32>
    %2 = vector.shape_cast %1 : vector<32x1x32xf32> to vector<32x1x32xf32>
    %3 = vector.broadcast %2 : vector<32x1x32xf32> to vector<32x4x32xf32>
    %c0_1 = arith.constant 0 : index
    %c0_2 = arith.constant 0 : index
    %c0_3 = arith.constant 0 : index
    %4 = vector.load %arg2[%c0_1, %c0_2, %c0_3] : memref<32x4x32xf32, #tpu.memory_space<vmem>>, vector<32x4x32xf32>
    tpu.vector_store %arg2[%c0_1, %c0_2, %c0_3], %3 {strides = array<i32>} : memref<32x4x32xf32, #tpu.memory_space<vmem>>, vector<32x4x32xf32>,
    return
  }
  func.func @transform_0(%arg0: i32) -> (i32, i32) {
    %c0_i32 = arith.constant 0 : i32
    %c0_i32_0 = arith.constant 0 : i32
    return %arg0, %c0_i32 : i32, i32
  }
  func.func @transform_1(%arg0: i32) -> (i32, i32, i32) {
    %c0_i32 = arith.constant 0 : i32
    %c0_i32_0 = arith.constant 0 : i32
    %c0_i32_1 = arith.constant 0 : i32
    return %arg0, %c0_i32, %c0_i32_0 : i32, i32, i32
  }
}

</mosaic_0001>

<llo_original>
// kernel: tpu_custom_call.1
$region0: #{tpu_custom_call.1}
  #allocation0 [shape = 'u32[]', space=smem, size = 0x4, offset = 0x4, fixed_abs, tag = 'smem constant byte address 0x4 - core index']
  #allocation1 [shape = 'u32[144,128]{1,0:T(1,128)}', space=vmem, size = 0x12000, scoped, tag = 'internal scratch']
  %s0 = inlined_call_operand.hbm [shape: f32[64,32], index: 0, kind: input, shape index: {}]
  %s1 = inlined_call_operand.hbm [shape: f32[64,4,32], index: 1, kind: output, shape index: {}]
  %s2 = sld [smem:[#allocation0]]
  $region41: #{tpu_custom_call.1} parent=0
    _
  %s4 = ssub.s32 1, %s2
  %s5 = scalar_select 0, %s4, %s2
  $region1: #{tpu_custom_call.1} parent=0
    #allocation2 [shape = 'u8[32768]{0}', space=vmem, size = 0x8000, scoped, tag = 'input window, operand 0']
    #allocation3 [shape = 's32[2]{0}', space=sflag, size = 0x8, scoped, tag = 'scoped memory for tpu_custom_call.1']
    #allocation4 [shape = 's32[2]{0}', space=sflag, size = 0x8, scoped, tag = 'scoped memory for tpu_custom_call.1']
    #allocation5 [shape = 'u8[131072]{0}', space=vmem, size = 0x20000, scoped, tag = 'output window, operand 0']
    %6 = vsyncpa [#allocation3], 0
    %s7 = scalar_lea.sflag [#allocation3], 1
    %8 = vsyncpa %s7, 0
    %9 = vsyncpa [#allocation4], 0
    %s10 = scalar_lea.sflag [#allocation4], 1
    %11 = vsyncpa %s10, 0
    loop: start=0, step=1, limit=4
    $region2: #{tpu_custom_call.1} parent=1 // loop_pre_header
      _
    $region3: #{tpu_custom_call.1} parent=1 // loop_header
      %s13 = sphi 0, %s17
      %p14 = scmp.ge.s32.totalorder %s13, 4
      %s23 = sphi 0, %s25
      %s26 = sphi 0, %s23
      %s27 = sphi 0, %s26
      %s43 = sphi 0, %s27
      %s49 = sphi 0, %s51
      %s52 = sphi 0, %s49
      %s53 = sphi 0, %s52
      %s69 = sphi 0, %s53
    $region4: #{tpu_custom_call.1} parent=1 // loop_header_branch
      %16 = sbr.rel (%p14) target = $region8
    $region5: #{tpu_custom_call.1} parent=1 // loop_body
      %s18 = ssub.s32 %s13, 1
      %s19 = ssub.s32 %s13, 2
      %s20 = sadd.s32 %s13, 1
      %s21 = ssub.s32 %s13, %s20
      %p22 = scmp.eq.s32.totalorder %s21, 0
      %s24 = sadd.s32 %s23, 1
      %s25 = scalar_select %p22, %s23, %s24
      %p28 = pneg %p22
      %p29 = scmp.eq.s32.totalorder %s13, 1
      %p30 = por %p28, %p29
      %p31 = scmp.ne.s32.totalorder %s23, %s26
      %p32 = scmp.eq.s32.totalorder %s13, 0
      %p33 = por %p31, %p32
      %p34 = scmp.ne.s32.totalorder %s23, %s26
      %p35 = scmp.eq.s32.totalorder %s18, 1
      %p36 = por %p34, %p35
      %p37 = scmp.ne.s32.totalorder %s26, %s27
      %p38 = scmp.eq.s32.totalorder %s18, 0
      %p39 = por %p37, %p38
      %p40 = scmp.ne.s32.totalorder %s26, %s27
      %p41 = scmp.eq.s32.totalorder %s19, 1
      %p42 = por %p40, %p41
      %p44 = scmp.ne.s32.totalorder %s27, %s43
      %p45 = scmp.eq.s32.totalorder %s19, 0
      %p46 = por %p44, %p45
      %s47 = ssub.s32 %s13, %s20
      %p48 = scmp.eq.s32.totalorder %s47, 0
      %s50 = sadd.s32 %s49, 1
      %s51 = scalar_select %p48, %s49, %s50
      %p54 = pneg %p48
      %p55 = scmp.eq.s32.totalorder %s13, 1
      %p56 = por %p54, %p55
      %p57 = scmp.ne.s32.totalorder %s49, %s52
      %p58 = scmp.eq.s32.totalorder %s13, 0
      %p59 = por %p57, %p58
      %p60 = scmp.ne.s32.totalorder %s49, %s52
      %p61 = scmp.eq.s32.totalorder %s18, 1
      %p62 = por %p60, %p61
      %p63 = scmp.ne.s32.totalorder %s52, %s53
      %p64 = scmp.eq.s32.totalorder %s18, 0
      %p65 = por %p63, %p64
      %p66 = scmp.ne.s32.totalorder %s52, %s53
      %p67 = scmp.eq.s32.totalorder %s19, 1
      %p68 = por %p66, %p67
      %p70 = scmp.ne.s32.totalorder %s53, %s69
      %p71 = scmp.eq.s32.totalorder %s19, 0
      %p72 = por %p70, %p71
      %p73 = scmp.le.s32.totalorder 1, %s13
      %p74 = scmp.lt.s32.totalorder %s13, 3
      %p75 = pnand %p73, %p74
      %p76 = pneg %p75
      // Predicated region
      $region9: #{tpu_custom_call.1} parent=5 // pred_check
        _
      $region10: #{tpu_custom_call.1} parent=5 // pred_check_branch
        %78 = sbr.rel (%p75) target = $region12
      $region11: #{tpu_custom_call.1} parent=5 // pred_region
        %s79 = ssub.s32 %s13, 1
      $region12: #{tpu_custom_call.1} parent=5 // pred_fallthru
        _
      %p80 = scmp.lt.s32.totalorder %s13, 2
      // Predicated region
      $region13: #{tpu_custom_call.1} parent=5 // pred_check
        %p81 = pneg %p80
      $region14: #{tpu_custom_call.1} parent=5 // pred_check_branch
        %83 = sbr.rel (%p81) target = $region16
      $region15: #{tpu_custom_call.1} parent=5 // pred_region
        // Predicated region
        $region17: #{tpu_custom_call.1} parent=15 // pred_check
          %p84 = pneg %p33
        $region18: #{tpu_custom_call.1} parent=15 // pred_check_branch
          %86 = sbr.rel (%p84) target = $region20
        $region19: #{tpu_custom_call.1} parent=15 // pred_region
          %s87 = sand.u32 %s23, 1
          %s88 = scalar_lea.sflag [#allocation3], %s87
          %s89 = sand.u32 %s23, 1
          %s90 = smul.addr %s89, 32
          %s91 = scalar_lea.vmem [#allocation2], %s90
          %s92 = smul.u32 4, %s13
          %s94 = ssub.s32 512, 512
          %95 = vsyncadd %s88, %s94
          %s96 = smul.addr %s92, 128
          %s97 = scalar_lea.hbm %s0, %s96
          %s98 = sshll.u32 %s91, 4
          %s99 = int_to_ptr.vmem [resolvable:$true] %s98
          %104 = dma.hbm_to_vmem [thread:$0]  %s97, 512, %s99, %s88, 128, 128, 8
        $region20: #{tpu_custom_call.1} parent=15 // pred_fallthru
          _
      $region16: #{tpu_custom_call.1} parent=5 // pred_fallthru
        _
      %p105 = scmp.le.s32.totalorder 1, %s13
      %p106 = scmp.lt.s32.totalorder %s13, 3
      %p107 = pnand %p105, %p106
      %p108 = pneg %p107
      // Predicated region
      $region21: #{tpu_custom_call.1} parent=5 // pred_check
        _
      $region22: #{tpu_custom_call.1} parent=5 // pred_check_branch
        %110 = sbr.rel (%p107) target = $region24
      $region23: #{tpu_custom_call.1} parent=5 // pred_region
        %s111 = ssub.s32 %s13, 1
        %s112 = sand.u32 %s26, 1
        %s113 = scalar_lea.sflag [#allocation3], %s112
        %s114 = sand.u32 %s26, 1
        %s115 = smul.addr %s114, 32
        %s116 = scalar_lea.vmem [#allocation2], %s115
        // Predicated region
        $region25: #{tpu_custom_call.1} parent=23 // pred_check
          %p117 = pneg %p39
        $region26: #{tpu_custom_call.1} parent=23 // pred_check_branch
          %119 = sbr.rel (%p117) target = $region28
        $region27: #{tpu_custom_call.1} parent=23 // pred_region
          %120 = dma.done %s113, 512
        $region28: #{tpu_custom_call.1} parent=23 // pred_fallthru
          _
        %s121 = sand.u32 %s26, 1
        %s122 = scalar_lea.sflag [#allocation3], %s121
        %s123 = sand.u32 %s26, 1
        %s124 = smul.addr %s123, 32
        %s125 = scalar_lea.vmem [#allocation2], %s124
        %p126 = pneg %p39
        %p127 = pneg %p36
        %p128 = pneg %p65
        %p129 = pneg %p62
        %s130 = sand.u32 %s52, 1
        %s131 = scalar_lea.sflag [#allocation4], %s130
        %s132 = sand.u32 %s52, 1
        %s133 = smul.addr %s132, 128
        %s134 = scalar_lea.vmem [#allocation5], %s133
        %s135 = smul.u32 4, %s18
        %s136 = smul.u32 32, %s18
        %v137 = vld [vmem:[%s116] sm:$0xff]
        %v138 = vld [vmem:[%s116 + $0x8] sm:$0xff]
        %v139 = vld [vmem:[%s116 + $0x10] sm:$0xff]
        %v140 = vld [vmem:[%s116 + $0x18] sm:$0xff]
        %v145 = vcombine.high %v137, %v137
        %v147 = vunpack.c.l.s4 1966171168
        %v148 = vunpack.c.0.s8 %v147
        %v149 = vlaneseq
        %v150 = vshrl.u32 %v149, 7
        %v151 = vsub.s32 %v148, %v150
        %v152 = vrot.slane %v137, %v151
        %v154 = vunpack.c.l.s4 1966171168
        %v155 = vunpack.c.0.s8 %v154
        %v156 = vlaneseq
        %v157 = vshrl.u32 %v156, 7
        %v158 = vsub.s32 %v155, %v157
        %v159 = vrot.slane %v145, %v158
        %v160 = vcombine.high %v152, %v152
        %v161 = vcombine.high %v159, %v159
        %v163 = vunpack.c.l.s4 1966171168
        %v164 = vunpack.c.0.s8 %v163
        %v165 = vlaneseq
        %v166 = vshrl.u32 %v165, 7
        %v167 = vsub.s32 %v164, %v166
        %v168 = vrot.slane %v152, %v167
        %v170 = vunpack.c.l.s4 1966171168
        %v171 = vunpack.c.0.s8 %v170
        %v172 = vlaneseq
        %v173 = vshrl.u32 %v172, 7
        %v174 = vsub.s32 %v171, %v173
        %v175 = vrot.slane %v159, %v174
        %v177 = vunpack.c.l.s4 1966171168
        %v178 = vunpack.c.0.s8 %v177
        %v179 = vlaneseq
        %v180 = vshrl.u32 %v179, 7
        %v181 = vsub.s32 %v178, %v180
        %v182 = vrot.slane %v160, %v181
        %v184 = vunpack.c.l.s4 1966171168
        %v185 = vunpack.c.0.s8 %v184
        %v186 = vlaneseq
        %v187 = vshrl.u32 %v186, 7
        %v188 = vsub.s32 %v185, %v187
        %v189 = vrot.slane %v161, %v188
        %v190 = vcombine.high %v168, %v168
        %v191 = vcombine.high %v175, %v175
        %v192 = vcombine.high %v182, %v182
        %v193 = vcombine.high %v189, %v189
        %v194 = vcombine.high %v138, %v138
        %v196 = vunpack.c.l.s4 1966171168
        %v197 = vunpack.c.0.s8 %v196
        %v198 = vlaneseq
        %v199 = vshrl.u32 %v198, 7
        %v200 = vsub.s32 %v197, %v199
        %v201 = vrot.slane %v138, %v200
        %v203 = vunpack.c.l.s4 1966171168
        %v204 = vunpack.c.0.s8 %v203
        %v205 = vlaneseq
        %v206 = vshrl.u32 %v205, 7
        %v207 = vsub.s32 %v204, %v206
        %v208 = vrot.slane %v194, %v207
        %v209 = vcombine.high %v201, %v201
        %v210 = vcombine.high %v208, %v208
        %v212 = vunpack.c.l.s4 1966171168
        %v213 = vunpack.c.0.s8 %v212
        %v214 = vlaneseq
        %v215 = vshrl.u32 %v214, 7
        %v216 = vsub.s32 %v213, %v215
        %v217 = vrot.slane %v201, %v216
        %v219 = vunpack.c.l.s4 1966171168
        %v220 = vunpack.c.0.s8 %v219
        %v221 = vlaneseq
        %v222 = vshrl.u32 %v221, 7
        %v223 = vsub.s32 %v220, %v222
        %v224 = vrot.slane %v208, %v223
        %v226 = vunpack.c.l.s4 1966171168
        %v227 = vunpack.c.0.s8 %v226
        %v228 = vlaneseq
        %v229 = vshrl.u32 %v228, 7
        %v230 = vsub.s32 %v227, %v229
        %v231 = vrot.slane %v209, %v230
        %v233 = vunpack.c.l.s4 1966171168
        %v234 = vunpack.c.0.s8 %v233
        %v235 = vlaneseq
        %v236 = vshrl.u32 %v235, 7
        %v237 = vsub.s32 %v234, %v236
        %v238 = vrot.slane %v210, %v237
        %v239 = vcombine.high %v217, %v217
        %v240 = vcombine.high %v224, %v224
        %v241 = vcombine.high %v231, %v231
        %v242 = vcombine.high %v238, %v238
        %v243 = vcombine.high %v139, %v139
        %v245 = vunpack.c.l.s4 1966171168
        %v246 = vunpack.c.0.s8 %v245
        %v247 = vlaneseq
        %v248 = vshrl.u32 %v247, 7
        %v249 = vsub.s32 %v246, %v248
        %v250 = vrot.slane %v139, %v249
        %v252 = vunpack.c.l.s4 1966171168
        %v253 = vunpack.c.0.s8 %v252
        %v254 = vlaneseq
        %v255 = vshrl.u32 %v254, 7
        %v256 = vsub.s32 %v253, %v255
        %v257 = vrot.slane %v243, %v256
        %v258 = vcombine.high %v250, %v250
        %v259 = vcombine.high %v257, %v257
        %v261 = vunpack.c.l.s4 1966171168
        %v262 = vunpack.c.0.s8 %v261
        %v263 = vlaneseq
        %v264 = vshrl.u32 %v263, 7
        %v265 = vsub.s32 %v262, %v264
        %v266 = vrot.slane %v250, %v265
        %v268 = vunpack.c.l.s4 1966171168
        %v269 = vunpack.c.0.s8 %v268
        %v270 = vlaneseq
        %v271 = vshrl.u32 %v270, 7
        %v272 = vsub.s32 %v269, %v271
        %v273 = vrot.slane %v257, %v272
        %v275 = vunpack.c.l.s4 1966171168
        %v276 = vunpack.c.0.s8 %v275
        %v277 = vlaneseq
        %v278 = vshrl.u32 %v277, 7
        %v279 = vsub.s32 %v276, %v278
        %v280 = vrot.slane %v258, %v279
        %v282 = vunpack.c.l.s4 1966171168
        %v283 = vunpack.c.0.s8 %v282
        %v284 = vlaneseq
        %v285 = vshrl.u32 %v284, 7
        %v286 = vsub.s32 %v283, %v285
        %v287 = vrot.slane %v259, %v286
        %v288 = vcombine.high %v266, %v266
        %v289 = vcombine.high %v273, %v273
        %v290 = vcombine.high %v280, %v280
        %v291 = vcombine.high %v287, %v287
        %v292 = vcombine.high %v140, %v140
        %v294 = vunpack.c.l.s4 1966171168
        %v295 = vunpack.c.0.s8 %v294
        %v296 = vlaneseq
        %v297 = vshrl.u32 %v296, 7
        %v298 = vsub.s32 %v295, %v297
        %v299 = vrot.slane %v140, %v298
        %v301 = vunpack.c.l.s4 1966171168
        %v302 = vunpack.c.0.s8 %v301
        %v303 = vlaneseq
        %v304 = vshrl.u32 %v303, 7
        %v305 = vsub.s32 %v302, %v304
        %v306 = vrot.slane %v292, %v305
        %v307 = vcombine.high %v299, %v299
        %v308 = vcombine.high %v306, %v306
        %v310 = vunpack.c.l.s4 1966171168
        %v311 = vunpack.c.0.s8 %v310
        %v312 = vlaneseq
        %v313 = vshrl.u32 %v312, 7
        %v314 = vsub.s32 %v311, %v313
        %v315 = vrot.slane %v299, %v314
        %v317 = vunpack.c.l.s4 1966171168
        %v318 = vunpack.c.0.s8 %v317
        %v319 = vlaneseq
        %v320 = vshrl.u32 %v319, 7
        %v321 = vsub.s32 %v318, %v320
        %v322 = vrot.slane %v306, %v321
        %v324 = vunpack.c.l.s4 1966171168
        %v325 = vunpack.c.0.s8 %v324
        %v326 = vlaneseq
        %v327 = vshrl.u32 %v326, 7
        %v328 = vsub.s32 %v325, %v327
        %v329 = vrot.slane %v307, %v328
        %v331 = vunpack.c.l.s4 1966171168
        %v332 = vunpack.c.0.s8 %v331
        %v333 = vlaneseq
        %v334 = vshrl.u32 %v333, 7
        %v335 = vsub.s32 %v332, %v334
        %v336 = vrot.slane %v308, %v335
        %v337 = vcombine.high %v315, %v315
        %v338 = vcombine.high %v322, %v322
        %v339 = vcombine.high %v329, %v329
        %v340 = vcombine.high %v336, %v336
        %v341 = vlaneseq
        %v342 = vshrl.u32 %v341, 7
        %v343 = vsub.s32 0, %v342
        %v344 = vrot.slane %v168, %v343
        %v345 = vlaneseq
        %v346 = vshrl.u32 %v345, 7
        %v347 = vsub.s32 0, %v346
        %v348 = vrot.slane %v182, %v347
        %v349 = vlaneseq
        %v350 = vshrl.u32 %v349, 7
        %v351 = vsub.s32 0, %v350
        %v352 = vrot.slane %v190, %v351
        %v353 = vlaneseq
        %v354 = vshrl.u32 %v353, 7
        %v355 = vsub.s32 0, %v354
        %v356 = vrot.slane %v192, %v355
        %v357 = vlaneseq
        %v358 = vshrl.u32 %v357, 7
        %v359 = vsub.s32 0, %v358
        %v360 = vrot.slane %v175, %v359
        %v361 = vlaneseq
        %v362 = vshrl.u32 %v361, 7
        %v363 = vsub.s32 0, %v362
        %v364 = vrot.slane %v189, %v363
        %v365 = vlaneseq
        %v366 = vshrl.u32 %v365, 7
        %v367 = vsub.s32 0, %v366
        %v368 = vrot.slane %v191, %v367
        %v369 = vlaneseq
        %v370 = vshrl.u32 %v369, 7
        %v371 = vsub.s32 0, %v370
        %v372 = vrot.slane %v193, %v371
        %v373 = vlaneseq
        %v374 = vshrl.u32 %v373, 7
        %v375 = vsub.s32 0, %v374
        %v376 = vrot.slane %v217, %v375
        %v377 = vlaneseq
        %v378 = vshrl.u32 %v377, 7
        %v379 = vsub.s32 0, %v378
        %v380 = vrot.slane %v231, %v379
        %v381 = vlaneseq
        %v382 = vshrl.u32 %v381, 7
        %v383 = vsub.s32 0, %v382
        %v384 = vrot.slane %v239, %v383
        %v385 = vlaneseq
        %v386 = vshrl.u32 %v385, 7
        %v387 = vsub.s32 0, %v386
        %v388 = vrot.slane %v241, %v387
        %v389 = vlaneseq
        %v390 = vshrl.u32 %v389, 7
        %v391 = vsub.s32 0, %v390
        %v392 = vrot.slane %v224, %v391
        %v393 = vlaneseq
        %v394 = vshrl.u32 %v393, 7
        %v395 = vsub.s32 0, %v394
        %v396 = vrot.slane %v238, %v395
        %v397 = vlaneseq
        %v398 = vshrl.u32 %v397, 7
        %v399 = vsub.s32 0, %v398
        %v400 = vrot.slane %v240, %v399
        %v401 = vlaneseq
        %v402 = vshrl.u32 %v401, 7
        %v403 = vsub.s32 0, %v402
        %v404 = vrot.slane %v242, %v403
        %v405 = vlaneseq
        %v406 = vshrl.u32 %v405, 7
        %v407 = vsub.s32 0, %v406
        %v408 = vrot.slane %v266, %v407
        %v409 = vlaneseq
        %v410 = vshrl.u32 %v409, 7
        %v411 = vsub.s32 0, %v410
        %v412 = vrot.slane %v280, %v411
        %v413 = vlaneseq
        %v414 = vshrl.u32 %v413, 7
        %v415 = vsub.s32 0, %v414
        %v416 = vrot.slane %v288, %v415
        %v417 = vlaneseq
        %v418 = vshrl.u32 %v417, 7
        %v419 = vsub.s32 0, %v418
        %v420 = vrot.slane %v290, %v419
        %v421 = vlaneseq
        %v422 = vshrl.u32 %v421, 7
        %v423 = vsub.s32 0, %v422
        %v424 = vrot.slane %v273, %v423
        %v425 = vlaneseq
        %v426 = vshrl.u32 %v425, 7
        %v427 = vsub.s32 0, %v426
        %v428 = vrot.slane %v287, %v427
        %v429 = vlaneseq
        %v430 = vshrl.u32 %v429, 7
        %v431 = vsub.s32 0, %v430
        %v432 = vrot.slane %v289, %v431
        %v433 = vlaneseq
        %v434 = vshrl.u32 %v433, 7
        %v435 = vsub.s32 0, %v434
        %v436 = vrot.slane %v291, %v435
        %v437 = vlaneseq
        %v438 = vshrl.u32 %v437, 7
        %v439 = vsub.s32 0, %v438
        %v440 = vrot.slane %v315, %v439
        %v441 = vlaneseq
        %v442 = vshrl.u32 %v441, 7
        %v443 = vsub.s32 0, %v442
        %v444 = vrot.slane %v329, %v443
        %v445 = vlaneseq
        %v446 = vshrl.u32 %v445, 7
        %v447 = vsub.s32 0, %v446
        %v448 = vrot.slane %v337, %v447
        %v449 = vlaneseq
        %v450 = vshrl.u32 %v449, 7
        %v451 = vsub.s32 0, %v450
        %v452 = vrot.slane %v339, %v451
        %v453 = vlaneseq
        %v454 = vshrl.u32 %v453, 7
        %v455 = vsub.s32 0, %v454
        %v456 = vrot.slane %v322, %v455
        %v457 = vlaneseq
        %v458 = vshrl.u32 %v457, 7
        %v459 = vsub.s32 0, %v458
        %v460 = vrot.slane %v336, %v459
        %v461 = vlaneseq
        %v462 = vshrl.u32 %v461, 7
        %v463 = vsub.s32 0, %v462
        %v464 = vrot.slane %v338, %v463
        %v465 = vlaneseq
        %v466 = vshrl.u32 %v465, 7
        %v467 = vsub.s32 0, %v466
        %v468 = vrot.slane %v340, %v467
        %vm501 = vcmask 257024
        %502 = vst.msk [vmem:[%s134] sm:$0xf] %vm501, %v344
        %503 = vst.msk [vmem:[%s134 + $0x4] sm:$0xf] %vm501, %v348
        %504 = vst.msk [vmem:[%s134 + $0x8] sm:$0xf] %vm501, %v352
        %505 = vst.msk [vmem:[%s134 + $0xc] sm:$0xf] %vm501, %v356
        %506 = vst.msk [vmem:[%s134 + $0x10] sm:$0xf] %vm501, %v360
        %507 = vst.msk [vmem:[%s134 + $0x14] sm:$0xf] %vm501, %v364
        %508 = vst.msk [vmem:[%s134 + $0x18] sm:$0xf] %vm501, %v368
        %509 = vst.msk [vmem:[%s134 + $0x1c] sm:$0xf] %vm501, %v372
        %510 = vst.msk [vmem:[%s134 + $0x20] sm:$0xf] %vm501, %v376
        %511 = vst.msk [vmem:[%s134 + $0x24] sm:$0xf] %vm501, %v380
        %512 = vst.msk [vmem:[%s134 + $0x28] sm:$0xf] %vm501, %v384
        %513 = vst.msk [vmem:[%s134 + $0x2c] sm:$0xf] %vm501, %v388
        %514 = vst.msk [vmem:[%s134 + $0x30] sm:$0xf] %vm501, %v392
        %515 = vst.msk [vmem:[%s134 + $0x34] sm:$0xf] %vm501, %v396
        %516 = vst.msk [vmem:[%s134 + $0x38] sm:$0xf] %vm501, %v400
        %517 = vst.msk [vmem:[%s134 + $0x3c] sm:$0xf] %vm501, %v404
        %518 = vst.msk [vmem:[%s134 + $0x40] sm:$0xf] %vm501, %v408
        %519 = vst.msk [vmem:[%s134 + $0x44] sm:$0xf] %vm501, %v412
        %520 = vst.msk [vmem:[%s134 + $0x48] sm:$0xf] %vm501, %v416
        %521 = vst.msk [vmem:[%s134 + $0x4c] sm:$0xf] %vm501, %v420
        %522 = vst.msk [vmem:[%s134 + $0x50] sm:$0xf] %vm501, %v424
        %523 = vst.msk [vmem:[%s134 + $0x54] sm:$0xf] %vm501, %v428
        %524 = vst.msk [vmem:[%s134 + $0x58] sm:$0xf] %vm501, %v432
        %525 = vst.msk [vmem:[%s134 + $0x5c] sm:$0xf] %vm501, %v436
        %526 = vst.msk [vmem:[%s134 + $0x60] sm:$0xf] %vm501, %v440
        %527 = vst.msk [vmem:[%s134 + $0x64] sm:$0xf] %vm501, %v444
        %528 = vst.msk [vmem:[%s134 + $0x68] sm:$0xf] %vm501, %v448
        %529 = vst.msk [vmem:[%s134 + $0x6c] sm:$0xf] %vm501, %v452
        %530 = vst.msk [vmem:[%s134 + $0x70] sm:$0xf] %vm501, %v456
        %531 = vst.msk [vmem:[%s134 + $0x74] sm:$0xf] %vm501, %v460
        %532 = vst.msk [vmem:[%s134 + $0x78] sm:$0xf] %vm501, %v464
        %533 = vst.msk [vmem:[%s134 + $0x7c] sm:$0xf] %vm501, %v468
        %s534 = sand.u32 %s52, 1
        %s535 = scalar_lea.sflag [#allocation4], %s534
        %s536 = sand.u32 %s52, 1
        %s537 = smul.addr %s536, 128
        %s538 = scalar_lea.vmem [#allocation5], %s537
        // Predicated region
        $region29: #{tpu_custom_call.1} parent=23 // pred_check
          %p539 = pneg %p62
        $region30: #{tpu_custom_call.1} parent=23 // pred_check_branch
          %541 = sbr.rel (%p539) target = $region32
        $region31: #{tpu_custom_call.1} parent=23 // pred_region
          %s542 = smul.u32 32, %s18
          %s544 = ssub.s32 2048, 2048
          %545 = vsyncadd %s535, %s544
          %s546 = smul.addr %s542, 64
          %s547 = scalar_lea.hbm %s1, %s546
          %s548 = sshll.u32 %s538, 4
          %s549 = int_to_ptr.vmem [resolvable:$true] %s548
          %554 = dma.vmem_to_hbm [thread:$0]  %s549, 2048, %s547, %s535, 64, 64, 4
        $region32: #{tpu_custom_call.1} parent=23 // pred_fallthru
          _
      $region24: #{tpu_custom_call.1} parent=5 // pred_fallthru
        _
      %p555 = scmp.le.s32.totalorder 2, %s13
      // Predicated region
      $region33: #{tpu_custom_call.1} parent=5 // pred_check
        %p556 = pneg %p555
      $region34: #{tpu_custom_call.1} parent=5 // pred_check_branch
        %558 = sbr.rel (%p556) target = $region36
      $region35: #{tpu_custom_call.1} parent=5 // pred_region
        %s559 = ssub.s32 %s13, 2
        // Predicated region
        $region37: #{tpu_custom_call.1} parent=35 // pred_check
          %p560 = pneg %p68
        $region38: #{tpu_custom_call.1} parent=35 // pred_check_branch
          %562 = sbr.rel (%p560) target = $region40
        $region39: #{tpu_custom_call.1} parent=35 // pred_region
          %s563 = sand.u32 %s53, 1
          %s564 = scalar_lea.sflag [#allocation4], %s563
          %s565 = sand.u32 %s53, 1
          %s566 = smul.addr %s565, 128
          %s567 = scalar_lea.vmem [#allocation5], %s566
          %568 = dma.done %s564, 2048
        $region40: #{tpu_custom_call.1} parent=35 // pred_fallthru
          _
      $region36: #{tpu_custom_call.1} parent=5 // pred_fallthru
        _
    $region6: #{tpu_custom_call.1} parent=1 // loop_footer
      %s17 = sadd.s32 1, %s13
    $region7: #{tpu_custom_call.1} parent=1 // loop_footer_branch
      %12 = sbr.rel target = $region3
    $region8: #{tpu_custom_call.1} parent=1 // loop_exit
      _
    %569 = vsyncpa [#allocation3], 1
    %s570 = scalar_lea.sflag [#allocation3], 1
    %571 = vsyncpa %s570, 1
    %572 = vsyncpa [#allocation4], 1
    %s573 = scalar_lea.sflag [#allocation4], 1
    %574 = vsyncpa %s573, 1

</llo_original>
